<compile_context>
chip_gen: v7x
topology: tpu7x:2x2x1
jax: 0.10.0
libtpu: 0.0.40
codegen_flags: <defaults>
</compile_context>

<pallas_src>
import functools

import jax
import jax.numpy as jnp
from jax import lax
from jax.experimental import pallas as pl
from jax.experimental.pallas import tpu as pltpu


_NEG_BIG = -1e30  # exp(_NEG_BIG) == 0.0 in f32; no inf/NaN arithmetic


def _round_up(x, m):
    return ((x + m - 1) // m) * m


def _dkd_block_kernel(t_ref, s_ref, tgt_ref, out_ref, *,
                      rho, n_valid_cols, n_valid_rows, tb, b_pad):
    """One batch tile: emit an (8,128) tile whose row-0 lanes 0/1/2 hold the
    per-block partial sums of ce / tckd / nckd (not yet divided by B)."""
    blk = pl.program_id(0)
    t = t_ref[...].astype(jnp.float32)          # (TB, Cp) teacher logits
    s = s_ref[...].astype(jnp.float32)          # (TB, Cp) student logits
    tgt = tgt_ref[...]                          # (TB, 1) int32 targets
    TB, Cp = t.shape

    pad_cols = n_valid_cols < Cp                # Python bools -> static
    pad_rows = n_valid_rows < b_pad             # specialization at trace time

    inv_rho = 1.0 / rho
    inv_c = 1.0 / n_valid_cols

    col = lax.broadcasted_iota(jnp.int32, (TB, Cp), 1)
    gt = col == tgt                             # ground-truth one-hot mask
    if pad_cols:
        valid = col < n_valid_cols              # lane-padding mask

    # ---- scale_normalize (pad columns are exactly 0 -> plain sums are valid)
    t_c = t - jnp.sum(t, axis=1, keepdims=True) * inv_c
    s_c = s - jnp.sum(s, axis=1, keepdims=True) * inv_c

    if pad_cols:
        max_t = jnp.max(jnp.where(valid, t_c, _NEG_BIG), axis=1, keepdims=True)
        max_s = jnp.max(jnp.where(valid, s_c, _NEG_BIG), axis=1, keepdims=True)
    else:
        max_t = jnp.max(t_c, axis=1, keepdims=True)
        max_s = jnp.max(s_c, axis=1, keepdims=True)

    # ---- adaptive temperatures: max logit / rho, clipped to >= 1 (per row)
    tea_temp = jnp.maximum(max_t * inv_rho, 1.0)
    stu_temp = jnp.maximum(max_s * inv_rho, 1.0)
    inv_tea = 1.0 / tea_temp                    # one per-row divide, reused
    inv_stu = 1.0 / stu_temp
    temp_prod = tea_temp * stu_temp

    # ---- shifted centered logits; pad columns forced very negative (exp -> 0)
    d_t = t_c - max_t
    d_s = s_c - max_s                           # shared: tempered-student & CE
    if pad_cols:
        d_t = jnp.where(valid, d_t, _NEG_BIG)
        d_s = jnp.where(valid, d_s, _NEG_BIG)

    zt = d_t * inv_tea                          # tempered teacher logits
    zs = d_s * inv_stu                          # tempered student logits
    e_t = jnp.exp(zt)                           # the only 3 full-tile exps
    e_s = jnp.exp(zs)
    e_ce = jnp.exp(d_s)                         # raw student, reuses d_s

    # ---- per-row target-column scalars (single masked lane gather per tensor)
    t_c_tgt = jnp.sum(jnp.where(gt, t_c, 0.0), axis=1, keepdims=True)
    s_c_tgt = jnp.sum(jnp.where(gt, s_c, 0.0), axis=1, keepdims=True)
    zt_tgt = (t_c_tgt - max_t) * inv_tea
    zs_tgt = (s_c_tgt - max_s) * inv_stu
    e_t_tgt = jnp.exp(zt_tgt)
    e_s_tgt = jnp.exp(zs_tgt)

    # ---- non-target exp mass reduced DIRECTLY (no 1 - p_tgt cancellation)
    z_t_other = jnp.sum(jnp.where(gt, 0.0, e_t), axis=1, keepdims=True)
    z_s_other = jnp.sum(jnp.where(gt, 0.0, e_s), axis=1, keepdims=True)
    z_t_sum = z_t_other + e_t_tgt
    z_s_sum = z_s_other + e_s_tgt
    z_ce_sum = jnp.sum(e_ce, axis=1, keepdims=True)

    log_zt_sum = jnp.log(z_t_sum)
    log_zs_sum = jnp.log(z_s_sum)
    log_zt_oth = jnp.log(z_t_other)
    log_zs_oth = jnp.log(z_s_other)

    # ---- CE on raw student logits (log_softmax is shift invariant)
    ce_row = -(s_c_tgt - max_s - jnp.log(z_ce_sum))                # (TB, 1)

    # ---- NCKD: KL over non-target classes of the tempered softmaxes.
    #      softmax(x/T - 1000*gt) == e / z_other on non-target columns, so
    #      Sum_other p*(logp - logq) = (1/z_t_other) * Sum e_t*(zt - zs + c)
    #      with c = log z_s_other - log z_t_other; the target column is
    #      removed via the already-gathered per-row scalars.
    c = log_zs_oth - log_zt_oth
    g_sum = jnp.sum(e_t * ((zt - zs) + c), axis=1, keepdims=True)
    g_tgt = e_t_tgt * (zt_tgt - zs_tgt + c)
    nckd_row = (g_sum - g_tgt) / z_t_other

    # ---- TCKD: binary KL over {target, non-target} probability mass
    p_t_tgt = e_t_tgt / z_t_sum
    om_t = z_t_other / z_t_sum
    logp_t_tgt = zt_tgt - log_zt_sum
    logp_s_tgt = zs_tgt - log_zs_sum
    log_om_t = log_zt_oth - log_zt_sum
    log_om_s = log_zs_oth - log_zs_sum
    tckd_row = (p_t_tgt * (logp_t_tgt - logp_s_tgt)
                + om_t * (log_om_t - log_om_s))

    # ---- per-block partial sums (pad rows masked out only when present)
    if pad_rows:
        row = blk * tb + lax.broadcasted_iota(jnp.int32, (TB, 1), 0)
        row_w = (row < n_valid_rows).astype(jnp.float32)
        ce_row = ce_row * row_w
        w = temp_prod * row_w
    else:
        w = temp_prod

    ce_part = jnp.sum(ce_row, keepdims=True)                        # (1,1)
    tckd_part = jnp.sum(tckd_row * w, keepdims=True)                # (1,1)
    nckd_part = jnp.sum(nckd_row * w, keepdims=True)                # (1,1)

    sub = lax.broadcasted_iota(jnp.int32, (8, 128), 0)
    lane = lax.broadcasted_iota(jnp.int32, (8, 128), 1)
    out_ref[...] = jnp.where((sub == 0) & (lane == 0), ce_part,
                             jnp.where((sub == 0) & (lane == 1), tckd_part,
                                       jnp.where((sub == 0) & (lane == 2),
                                                 nckd_part, 0.0)))


def dkdadakd_loss(teacher_logits, student_logits, target, epoch,
                  dkd_alpha=1.0, dkd_beta=2.0, ce_weight=1.0, kl_weight=1.0,
                  rho=3.0, warmup=1.0):
    B, C = teacher_logits.shape
    c_pad = _round_up(max(C, 128), 128)

    # ---- generation-aware VMEM budget --------------------------------------
    try:
        vmem_cap = int(pltpu.get_tpu_info().vmem_capacity_bytes)
    except Exception:
        vmem_cap = 64 * 1024 * 1024            # v7x-safe fallback
    # Scoped-VMEM limit: half of physical, never above 64 MiB (32 MiB on v7x).
    vmem_limit = min(max(vmem_cap // 2, 16 * 1024 * 1024), 64 * 1024 * 1024)
    # Working-set budget for one batch block: a quarter of physical VMEM.
    budget = vmem_cap // 4

    # Bytes per (row, class) element while one block is live:
    #   2 inputs x 2 pipeline buffers in native dtype + ~12 live f32 temporaries.
    in_itemsize = teacher_logits.dtype.itemsize
    per_elem = 2 * 2 * in_itemsize + 12 * 4
    tb = budget // (per_elem * c_pad)
    tb = max(8, min(2048, (tb // 8) * 8))

    b_ceil8 = _round_up(B, 8)
    tb = min(tb, b_ceil8)
    # Keep >= 2 batch blocks when possible so the "parallel" axis shards across
    # both TensorCores on v7x (harmless on single-TC v5e/v6e).
    if b_ceil8 >= 16:
        tb = min(tb, max(8, ((b_ceil8 // 2) // 8) * 8))
    b_pad = _round_up(B, tb)
    nb = b_pad // tb
    # TODO(synk): for very large class counts (c_pad >= ~8K, e.g. LLM vocab
    # distillation) add a second "arbitrary" grid axis over classes with
    # online-softmax style running max/sum accumulators instead of shrinking tb.

    # Zero-pad in native dtype (pass bf16 logits on v5e/v6e to halve HBM bytes;
    # the kernel casts to f32 on load).
    t_p = jnp.pad(teacher_logits, ((0, b_pad - B), (0, c_pad - C)))
    s_p = jnp.pad(student_logits, ((0, b_pad - B), (0, c_pad - C)))
    tgt = jnp.pad(target.reshape(-1).astype(jnp.int32),
                  (0, b_pad - B)).reshape(b_pad, 1)

    kernel = functools.partial(_dkd_block_kernel, rho=float(rho),
                               n_valid_cols=int(C), n_valid_rows=int(B),
                               tb=int(tb), b_pad=int(b_pad))

    partials = pl.pallas_call(
        kernel,
        out_shape=jax.ShapeDtypeStruct((nb * 8, 128), jnp.float32),
        grid_spec=pltpu.PrefetchScalarGridSpec(
            num_scalar_prefetch=0,
            grid=(nb,),
            in_specs=[
                pl.BlockSpec((tb, c_pad), lambda i: (i, 0)),
                pl.BlockSpec((tb, c_pad), lambda i: (i, 0)),
                pl.BlockSpec((tb, 1), lambda i: (i, 0)),
            ],
            out_specs=pl.BlockSpec((8, 128), lambda i: (i, 0)),
        ),
        compiler_params=pltpu.CompilerParams(
            dimension_semantics=("parallel",),
            vmem_limit_bytes=int(vmem_limit),
        ),
    )(t_p, s_p, tgt)

    sums = jnp.sum(partials, axis=0)            # (128,)
    inv_b = 1.0 / float(B)
    ce = sums[0] * inv_b
    tckd = sums[1] * inv_b
    nckd = sums[2] * inv_b

    # jit-safe warmup factor (epoch may be a traced scalar)
    factor = jnp.minimum(jnp.asarray(epoch, jnp.float32) / float(warmup), 1.0)
    loss = ce_weight * ce + factor * (dkd_alpha * tckd + dkd_beta * nckd * kl_weight)
    return loss, (ce, tckd, nckd)


# ---- pure-JAX reference (mirrors the PyTorch forward) for a sanity check ----
def _reference(teacher_logits, student_logits, target, epoch,
               dkd_alpha=1.0, dkd_beta=2.0, ce_weight=1.0, kl_weight=1.0,
               rho=3.0, warmup=1.0):
    B, C = teacher_logits.shape
    t = teacher_logits.astype(jnp.float32)
    s = student_logits.astype(jnp.float32)
    onehot = jax.nn.one_hot(target, C, dtype=jnp.float32)

    ce = -jnp.mean(jnp.sum(jax.nn.log_softmax(s, axis=1) * onehot, axis=1))

    t = t - t.mean(axis=1, keepdims=True)
    s = s - s.mean(axis=1, keepdims=True)
    tea_temp = jnp.maximum(t.max(axis=1, keepdims=True) / rho, 1.0)
    stu_temp = jnp.maximum(s.max(axis=1, keepdims=True) / rho, 1.0)

    log_pt2 = jax.nn.log_softmax(t / tea_temp - 1000.0 * onehot, axis=1)
    log_ps2 = jax.nn.log_softmax(s / stu_temp - 1000.0 * onehot, axis=1)
    nckd = jnp.sum(jnp.exp(log_pt2) * (log_pt2 - log_ps2) * (tea_temp * stu_temp)) / B

    ps = jax.nn.softmax(s / stu_temp, axis=1)
    pt = jax.nn.softmax(t / tea_temp, axis=1)
    ps2 = jnp.concatenate([(ps * onehot).sum(1, keepdims=True),
                           (ps * (1 - onehot)).sum(1, keepdims=True)], axis=1)
    pt2 = jnp.concatenate([(pt * onehot).sum(1, keepdims=True),
                           (pt * (1 - onehot)).sum(1, keepdims=True)], axis=1)
    tckd = jnp.sum(pt2 * (jnp.log(pt2) - jnp.log(ps2)) * (tea_temp * stu_temp)) / B

    factor = min(float(epoch) / float(warmup), 1.0)
    return ce_weight * ce + factor * (dkd_alpha * tckd + dkd_beta * nckd * kl_weight)


if __name__ == "__main__":
    key = jax.random.PRNGKey(0)
    epoch = 1

    # Case 1: B not a multiple of 8 and C not a multiple of 128 -> exercises
    # both the batch-row and class-lane padding/masking paths.
    k1, k2, k3 = jax.random.split(key, 3)
    B, C = 10, 40
    teacher_logits = jax.random.normal(k1, (B, C), dtype=jnp.float32) * 2.0
    student_logits = jax.random.normal(k2, (B, C), dtype=jnp.float32) * 2.0
    target = jax.random.randint(k3, (B,), 0, C, dtype=jnp.int32)

    loss, _ = dkdadakd_loss(teacher_logits, student_logits, target, epoch)
    loss = jax.block_until_ready(loss)
    ref = _reference(teacher_logits, student_logits, target, epoch)
    assert jnp.allclose(loss, ref, rtol=2e-4, atol=2e-4), (loss, ref)

    # Case 2: lane-aligned C (no column mask path), two batch blocks, and a
    # confident (large-margin) teacher -> exercises the cancellation-safe
    # non-target-mass path.
    k4, k5, k6 = jax.random.split(jax.random.PRNGKey(1), 3)
    B2, C2 = 16, 128
    teacher_logits2 = jax.random.normal(k4, (B2, C2), dtype=jnp.float32) * 6.0
    student_logits2 = jax.random.normal(k5, (B2, C2), dtype=jnp.float32) * 3.0
    target2 = jax.random.randint(k6, (B2,), 0, C2, dtype=jnp.int32)

    loss2, _ = dkdadakd_loss(teacher_logits2, student_logits2, target2, epoch)
    loss2 = jax.block_until_ready(loss2)
    ref2 = _reference(teacher_logits2, student_logits2, target2, epoch)
    assert bool(jnp.isfinite(loss2)), loss2
    assert jnp.allclose(loss2, ref2, rtol=2e-4, atol=2e-4), (loss2, ref2)

    print("KERNEL_OK")
</pallas_src>

<mosaic_0001>
module attributes {stable_mosaic.version = 11 : i64} {
  func.func @_dkd_block_kernel(%arg0: i32, %arg1: memref<8x128xf32, #tpu.memory_space<vmem>>, %arg2: memref<8x128xf32, #tpu.memory_space<vmem>>, %arg3: memref<8x1xi32, #tpu.memory_space<vmem>>, %arg4: memref<8x128xf32, #tpu.memory_space<vmem>>) attributes {dimension_semantics = [#tpu.dimension_semantics<parallel>], iteration_bounds = array<i64: 2>, scalar_prefetch = 0 : i64, scratch_operands = 0 : i64, tpu.core_type = #tpu.core_type<tc>, window_params = [{transform_indices = @transform_0, window_bounds = array<i64: 8, 128>}, {transform_indices = @transform_1, window_bounds = array<i64: 8, 128>}, {transform_indices = @transform_2, window_bounds = array<i64: 8, 1>}, {transform_indices = @transform_3, window_bounds = array<i64: 8, 128>}]} {
    %c0 = arith.constant 0 : index
    %c0_0 = arith.constant 0 : index
    %0 = vector.load %arg1[%c0, %c0_0] : memref<8x128xf32, #tpu.memory_space<vmem>>, vector<8x128xf32>
    %c0_1 = arith.constant 0 : index
    %c0_2 = arith.constant 0 : index
    %1 = vector.load %arg2[%c0_1, %c0_2] : memref<8x128xf32, #tpu.memory_space<vmem>>, vector<8x128xf32>
    %c0_3 = arith.constant 0 : index
    %c0_4 = arith.constant 0 : index
    %2 = vector.load %arg3[%c0_3, %c0_4] : memref<8x1xi32, #tpu.memory_space<vmem>>, vector<8x1xi32>
    %3 = tpu.iota {dimensions = array<i32: 1>} : vector<8x128xi32>
    %4 = vector.broadcast %2 : vector<8x1xi32> to vector<8x128xi32>
    %5 = arith.cmpi eq, %3, %4 : vector<8x128xi32>
    %c40_i32 = arith.constant 40 : i32
    %6 = vector.broadcast %c40_i32 : i32 to vector<8x128xi32>
    %7 = arith.cmpi slt, %3, %6 : vector<8x128xi32>
    %cst = arith.constant dense<0.000000e+00> : vector<8xf32>
    %8 = vector.multi_reduction <add>, %0, %cst [1] : vector<8x128xf32> to vector<8xf32>
    %9 = vector.shape_cast %8 : vector<8xf32> to vector<8x1xf32>
    %cst_5 = arith.constant 2.500000e-02 : f32
    %10 = vector.broadcast %cst_5 : f32 to vector<8x1xf32>
    %11 = arith.mulf %9, %10 : vector<8x1xf32>
    %12 = vector.broadcast %11 : vector<8x1xf32> to vector<8x128xf32>
    %13 = arith.subf %0, %12 : vector<8x128xf32>
    %cst_6 = arith.constant dense<0.000000e+00> : vector<8xf32>
    %14 = vector.multi_reduction <add>, %1, %cst_6 [1] : vector<8x128xf32> to vector<8xf32>
    %15 = vector.shape_cast %14 : vector<8xf32> to vector<8x1xf32>
    %cst_7 = arith.constant 2.500000e-02 : f32
    %16 = vector.broadcast %cst_7 : f32 to vector<8x1xf32>
    %17 = arith.mulf %15, %16 : vector<8x1xf32>
    %18 = vector.broadcast %17 : vector<8x1xf32> to vector<8x128xf32>
    %19 = arith.subf %1, %18 : vector<8x128xf32>
    %cst_8 = arith.constant -1.000000e+30 : f32
    %20 = vector.broadcast %cst_8 : f32 to vector<8x128xf32>
    %21 = arith.select %7, %13, %20 : vector<8x128xi1>, vector<8x128xf32>
    %cst_9 = arith.constant dense<0xFF800000> : vector<8xf32>
    %22 = vector.multi_reduction <maximumf>, %21, %cst_9 [1] : vector<8x128xf32> to vector<8xf32>
    %23 = vector.shape_cast %22 : vector<8xf32> to vector<8x1xf32>
    %cst_10 = arith.constant -1.000000e+30 : f32
    %24 = vector.broadcast %cst_10 : f32 to vector<8x128xf32>
    %25 = arith.select %7, %19, %24 : vector<8x128xi1>, vector<8x128xf32>
    %cst_11 = arith.constant dense<0xFF800000> : vector<8xf32>
    %26 = vector.multi_reduction <maximumf>, %25, %cst_11 [1] : vector<8x128xf32> to vector<8xf32>
    %27 = vector.shape_cast %26 : vector<8xf32> to vector<8x1xf32>
    %cst_12 = arith.constant 0.333333343 : f32
    %28 = vector.broadcast %cst_12 : f32 to vector<8x1xf32>
    %29 = arith.mulf %23, %28 : vector<8x1xf32>
    %cst_13 = arith.constant 1.000000e+00 : f32
    %30 = vector.broadcast %cst_13 : f32 to vector<8x1xf32>
    %31 = arith.maximumf %29, %30 : vector<8x1xf32>
    %cst_14 = arith.constant 0.333333343 : f32
    %32 = vector.broadcast %cst_14 : f32 to vector<8x1xf32>
    %33 = arith.mulf %27, %32 : vector<8x1xf32>
    %cst_15 = arith.constant 1.000000e+00 : f32
    %34 = vector.broadcast %cst_15 : f32 to vector<8x1xf32>
    %35 = arith.maximumf %33, %34 : vector<8x1xf32>
    %cst_16 = arith.constant 1.000000e+00 : f32
    %36 = vector.broadcast %cst_16 : f32 to vector<8x1xf32>
    %37 = arith.divf %36, %31 : vector<8x1xf32>
    %cst_17 = arith.constant 1.000000e+00 : f32
    %38 = vector.broadcast %cst_17 : f32 to vector<8x1xf32>
    %39 = arith.divf %38, %35 : vector<8x1xf32>
    %40 = arith.mulf %31, %35 : vector<8x1xf32>
    %41 = vector.broadcast %23 : vector<8x1xf32> to vector<8x128xf32>
    %42 = arith.subf %13, %41 : vector<8x128xf32>
    %43 = vector.broadcast %27 : vector<8x1xf32> to vector<8x128xf32>
    %44 = arith.subf %19, %43 : vector<8x128xf32>
    %cst_18 = arith.constant -1.000000e+30 : f32
    %45 = vector.broadcast %cst_18 : f32 to vector<8x128xf32>
    %46 = arith.select %7, %42, %45 : vector<8x128xi1>, vector<8x128xf32>
    %cst_19 = arith.constant -1.000000e+30 : f32
    %47 = vector.broadcast %cst_19 : f32 to vector<8x128xf32>
    %48 = arith.select %7, %44, %47 : vector<8x128xi1>, vector<8x128xf32>
    %49 = vector.broadcast %37 : vector<8x1xf32> to vector<8x128xf32>
    %50 = arith.mulf %46, %49 : vector<8x128xf32>
    %51 = vector.broadcast %39 : vector<8x1xf32> to vector<8x128xf32>
    %52 = arith.mulf %48, %51 : vector<8x128xf32>
    %53 = math.exp %50 : vector<8x128xf32>
    %54 = math.exp %52 : vector<8x128xf32>
    %55 = math.exp %48 : vector<8x128xf32>
    %cst_20 = arith.constant 0.000000e+00 : f32
    %56 = vector.broadcast %cst_20 : f32 to vector<8x128xf32>
    %57 = arith.select %5, %13, %56 : vector<8x128xi1>, vector<8x128xf32>
    %cst_21 = arith.constant dense<0.000000e+00> : vector<8xf32>
    %58 = vector.multi_reduction <add>, %57, %cst_21 [1] : vector<8x128xf32> to vector<8xf32>
    %59 = vector.shape_cast %58 : vector<8xf32> to vector<8x1xf32>
    %cst_22 = arith.constant 0.000000e+00 : f32
    %60 = vector.broadcast %cst_22 : f32 to vector<8x128xf32>
    %61 = arith.select %5, %19, %60 : vector<8x128xi1>, vector<8x128xf32>
    %cst_23 = arith.constant dense<0.000000e+00> : vector<8xf32>
    %62 = vector.multi_reduction <add>, %61, %cst_23 [1] : vector<8x128xf32> to vector<8xf32>
    %63 = vector.shape_cast %62 : vector<8xf32> to vector<8x1xf32>
    %64 = arith.subf %59, %23 : vector<8x1xf32>
    %65 = arith.mulf %64, %37 : vector<8x1xf32>
    %66 = arith.subf %63, %27 : vector<8x1xf32>
    %67 = arith.mulf %66, %39 : vector<8x1xf32>
    %68 = math.exp %65 : vector<8x1xf32>
    %69 = math.exp %67 : vector<8x1xf32>
    %cst_24 = arith.constant 0.000000e+00 : f32
    %70 = vector.broadcast %cst_24 : f32 to vector<8x128xf32>
    %71 = arith.select %5, %70, %53 : vector<8x128xi1>, vector<8x128xf32>
    %cst_25 = arith.constant dense<0.000000e+00> : vector<8xf32>
    %72 = vector.multi_reduction <add>, %71, %cst_25 [1] : vector<8x128xf32> to vector<8xf32>
    %73 = vector.shape_cast %72 : vector<8xf32> to vector<8x1xf32>
    %cst_26 = arith.constant 0.000000e+00 : f32
    %74 = vector.broadcast %cst_26 : f32 to vector<8x128xf32>
    %75 = arith.select %5, %74, %54 : vector<8x128xi1>, vector<8x128xf32>
    %cst_27 = arith.constant dense<0.000000e+00> : vector<8xf32>
    %76 = vector.multi_reduction <add>, %75, %cst_27 [1] : vector<8x128xf32> to vector<8xf32>
    %77 = vector.shape_cast %76 : vector<8xf32> to vector<8x1xf32>
    %78 = arith.addf %73, %68 : vector<8x1xf32>
    %79 = arith.addf %77, %69 : vector<8x1xf32>
    %cst_28 = arith.constant dense<0.000000e+00> : vector<8xf32>
    %80 = vector.multi_reduction <add>, %55, %cst_28 [1] : vector<8x128xf32> to vector<8xf32>
    %81 = vector.shape_cast %80 : vector<8xf32> to vector<8x1xf32>
    %82 = math.log %78 : vector<8x1xf32>
    %83 = math.log %79 : vector<8x1xf32>
    %84 = math.log %73 : vector<8x1xf32>
    %85 = math.log %77 : vector<8x1xf32>
    %86 = arith.subf %63, %27 : vector<8x1xf32>
    %87 = math.log %81 : vector<8x1xf32>
    %88 = arith.subf %86, %87 : vector<8x1xf32>
    %cst_29 = arith.constant 0.000000e+00 : f32
    %89 = vector.broadcast %cst_29 : f32 to vector<8x1xf32>
    %90 = arith.subf %89, %88 : vector<8x1xf32>
    %91 = arith.subf %85, %84 : vector<8x1xf32>
    %92 = arith.subf %50, %52 : vector<8x128xf32>
    %93 = vector.broadcast %91 : vector<8x1xf32> to vector<8x128xf32>
    %94 = arith.addf %92, %93 : vector<8x128xf32>
    %95 = arith.mulf %53, %94 : vector<8x128xf32>
    %cst_30 = arith.constant dense<0.000000e+00> : vector<8xf32>
    %96 = vector.multi_reduction <add>, %95, %cst_30 [1] : vector<8x128xf32> to vector<8xf32>
    %97 = vector.shape_cast %96 : vector<8xf32> to vector<8x1xf32>
    %98 = arith.subf %65, %67 : vector<8x1xf32>
    %99 = arith.addf %98, %91 : vector<8x1xf32>
    %100 = arith.mulf %68, %99 : vector<8x1xf32>
    %101 = arith.subf %97, %100 : vector<8x1xf32>
    %102 = arith.divf %101, %73 : vector<8x1xf32>
    %103 = arith.divf %68, %78 : vector<8x1xf32>
    %104 = arith.divf %73, %78 : vector<8x1xf32>
    %105 = arith.subf %65, %82 : vector<8x1xf32>
    %106 = arith.subf %67, %83 : vector<8x1xf32>
    %107 = arith.subf %84, %82 : vector<8x1xf32>
    %108 = arith.subf %85, %83 : vector<8x1xf32>
    %109 = arith.subf %105, %106 : vector<8x1xf32>
    %110 = arith.mulf %103, %109 : vector<8x1xf32>
    %111 = arith.subf %107, %108 : vector<8x1xf32>
    %112 = arith.mulf %104, %111 : vector<8x1xf32>
    %113 = arith.addf %110, %112 : vector<8x1xf32>
    %c8_i32 = arith.constant 8 : i32
    %114 = arith.muli %arg0, %c8_i32 : i32
    %115 = tpu.iota {dimensions = array<i32: 0>} : vector<8x1xi32>
    %116 = vector.broadcast %114 : i32 to vector<8x1xi32>
    %117 = arith.addi %116, %115 : vector<8x1xi32>
    %c10_i32 = arith.constant 10 : i32
    %118 = vector.broadcast %c10_i32 : i32 to vector<8x1xi32>
    %119 = arith.cmpi slt, %117, %118 : vector<8x1xi32>
    %120 = arith.extui %119 : vector<8x1xi1> to vector<8x1xi32>
    %121 = arith.sitofp %120 : vector<8x1xi32> to vector<8x1xf32>
    %122 = arith.mulf %90, %121 : vector<8x1xf32>
    %123 = arith.mulf %40, %121 : vector<8x1xf32>
    %124 = vector.shape_cast %122 : vector<8x1xf32> to vector<1x8x1xf32>
    %cst_31 = arith.constant dense<0.000000e+00> : vector<1xf32>
    %125 = vector.multi_reduction <add>, %124, %cst_31 [1, 2] : vector<1x8x1xf32> to vector<1xf32>
    %126 = vector.shape_cast %125 : vector<1xf32> to vector<1x1x1xf32>
    %127 = vector.extract %126[0, 0, 0] : f32 from vector<1x1x1xf32>
    %128 = vector.broadcast %127 : f32 to vector<1x1xf32>
    %129 = arith.mulf %113, %123 : vector<8x1xf32>
    %130 = vector.shape_cast %129 : vector<8x1xf32> to vector<1x8x1xf32>
    %cst_32 = arith.constant dense<0.000000e+00> : vector<1xf32>
    %131 = vector.multi_reduction <add>, %130, %cst_32 [1, 2] : vector<1x8x1xf32> to vector<1xf32>
    %132 = vector.shape_cast %131 : vector<1xf32> to vector<1x1x1xf32>
    %133 = vector.extract %132[0, 0, 0] : f32 from vector<1x1x1xf32>
    %134 = vector.broadcast %133 : f32 to vector<1x1xf32>
    %135 = arith.mulf %102, %123 : vector<8x1xf32>
    %136 = vector.shape_cast %135 : vector<8x1xf32> to vector<1x8x1xf32>
    %cst_33 = arith.constant dense<0.000000e+00> : vector<1xf32>
    %137 = vector.multi_reduction <add>, %136, %cst_33 [1, 2] : vector<1x8x1xf32> to vector<1xf32>
    %138 = vector.shape_cast %137 : vector<1xf32> to vector<1x1x1xf32>
    %139 = vector.extract %138[0, 0, 0] : f32 from vector<1x1x1xf32>
    %140 = vector.broadcast %139 : f32 to vector<1x1xf32>
    %141 = tpu.iota {dimensions = array<i32: 0>} : vector<8x128xi32>
    %142 = tpu.iota {dimensions = array<i32: 1>} : vector<8x128xi32>
    %c0_i32 = arith.constant 0 : i32
    %143 = vector.broadcast %c0_i32 : i32 to vector<8x128xi32>
    %144 = arith.cmpi eq, %141, %143 : vector<8x128xi32>
    %c0_i32_34 = arith.constant 0 : i32
    %145 = vector.broadcast %c0_i32_34 : i32 to vector<8x128xi32>
    %146 = arith.cmpi eq, %142, %145 : vector<8x128xi32>
    %147 = arith.andi %144, %146 : vector<8x128xi1>
    %c0_i32_35 = arith.constant 0 : i32
    %148 = vector.broadcast %c0_i32_35 : i32 to vector<8x128xi32>
    %149 = arith.cmpi eq, %141, %148 : vector<8x128xi32>
    %c1_i32 = arith.constant 1 : i32
    %150 = vector.broadcast %c1_i32 : i32 to vector<8x128xi32>
    %151 = arith.cmpi eq, %142, %150 : vector<8x128xi32>
    %152 = arith.andi %149, %151 : vector<8x128xi1>
    %c0_i32_36 = arith.constant 0 : i32
    %153 = vector.broadcast %c0_i32_36 : i32 to vector<8x128xi32>
    %154 = arith.cmpi eq, %141, %153 : vector<8x128xi32>
    %c2_i32 = arith.constant 2 : i32
    %155 = vector.broadcast %c2_i32 : i32 to vector<8x128xi32>
    %156 = arith.cmpi eq, %142, %155 : vector<8x128xi32>
    %157 = arith.andi %154, %156 : vector<8x128xi1>
    %cst_37 = arith.constant 0.000000e+00 : f32
    %158 = vector.shape_cast %140 : vector<1x1xf32> to vector<1x1xf32>
    %159 = vector.broadcast %158 : vector<1x1xf32> to vector<8x128xf32>
    %160 = vector.broadcast %cst_37 : f32 to vector<8x128xf32>
    %161 = arith.select %157, %159, %160 : vector<8x128xi1>, vector<8x128xf32>
    %162 = vector.shape_cast %134 : vector<1x1xf32> to vector<1x1xf32>
    %163 = vector.broadcast %162 : vector<1x1xf32> to vector<8x128xf32>
    %164 = arith.select %152, %163, %161 : vector<8x128xi1>, vector<8x128xf32>
    %165 = vector.shape_cast %128 : vector<1x1xf32> to vector<1x1xf32>
    %166 = vector.broadcast %165 : vector<1x1xf32> to vector<8x128xf32>
    %167 = arith.select %147, %166, %164 : vector<8x128xi1>, vector<8x128xf32>
    %c0_38 = arith.constant 0 : index
    %c0_39 = arith.constant 0 : index
    %168 = vector.load %arg4[%c0_38, %c0_39] : memref<8x128xf32, #tpu.memory_space<vmem>>, vector<8x128xf32>
    tpu.vector_store %arg4[%c0_38, %c0_39], %167 {strides = array<i32>} : memref<8x128xf32, #tpu.memory_space<vmem>>, vector<8x128xf32>,
    return
  }
  func.func @transform_0(%arg0: i32) -> (i32, i32) {
    %c0_i32 = arith.constant 0 : i32
    %c0_i32_0 = arith.constant 0 : i32
    return %arg0, %c0_i32 : i32, i32
  }
  func.func @transform_1(%arg0: i32) -> (i32, i32) {
    %c0_i32 = arith.constant 0 : i32
    %c0_i32_0 = arith.constant 0 : i32
    return %arg0, %c0_i32 : i32, i32
  }
  func.func @transform_2(%arg0: i32) -> (i32, i32) {
    %c0_i32 = arith.constant 0 : i32
    %c0_i32_0 = arith.constant 0 : i32
    return %arg0, %c0_i32 : i32, i32
  }
  func.func @transform_3(%arg0: i32) -> (i32, i32) {
    %c0_i32 = arith.constant 0 : i32
    %c0_i32_0 = arith.constant 0 : i32
    return %arg0, %c0_i32 : i32, i32
  }
}

</mosaic_0001>

<llo_original>
// kernel: tpu_custom_call.1
$region0: #{tpu_custom_call.1}
  #allocation0 [shape = 'u32[]', space=smem, size = 0x4, offset = 0x4, fixed_abs, tag = 'smem constant byte address 0x4 - core index']
  #allocation1 [shape = 'u32[144,128]{1,0:T(1,128)}', space=vmem, size = 0x12000, scoped, tag = 'internal scratch']
  %s0 = inlined_call_operand.vmem [shape: f32[16,128], index: 0, kind: input, shape index: {}]
  %s1 = inlined_call_operand.hbm [shape: f32[16,128], index: 1, kind: input, shape index: {}]
  %s2 = inlined_call_operand.vmem [shape: s32[16,1], index: 2, kind: input, shape index: {}]
  %s3 = inlined_call_operand.hbm [shape: f32[16,128], index: 3, kind: output, shape index: {}]
  %s4 = sld [smem:[#allocation0]]
  $region49: #{tpu_custom_call.1} parent=0
    _
  %s6 = ssub.s32 1, %s4
  %s7 = scalar_select 0, %s6, %s4
  $region1: #{tpu_custom_call.1} parent=0
    #allocation2 [shape = 'u8[8192]{0}', space=vmem, size = 0x2000, scoped, tag = 'input window, operand 1']
    #allocation3 [shape = 's32[2]{0}', space=sflag, size = 0x8, scoped, tag = 'scoped memory for tpu_custom_call.1']
    #allocation4 [shape = 's32[2]{0}', space=sflag, size = 0x8, scoped, tag = 'scoped memory for tpu_custom_call.1']
    #allocation5 [shape = 'u8[8192]{0}', space=vmem, size = 0x2000, scoped, tag = 'output window, operand 0']
    %8 = vsyncpa [#allocation3], 0
    %s9 = scalar_lea.sflag [#allocation3], 1
    %10 = vsyncpa %s9, 0
    %11 = vsyncpa [#allocation4], 0
    %s12 = scalar_lea.sflag [#allocation4], 1
    %13 = vsyncpa %s12, 0
    loop: start=0, step=1, limit=4
    $region2: #{tpu_custom_call.1} parent=1 // loop_pre_header
      _
    $region3: #{tpu_custom_call.1} parent=1 // loop_header
      %s15 = sphi 0, %s19
      %p16 = scmp.ge.s32.totalorder %s15, 4
      %s25 = sphi 0, %s27
      %s28 = sphi 0, %s25
      %s29 = sphi 0, %s28
      %s45 = sphi 0, %s29
      %s51 = sphi 0, %s53
      %s54 = sphi 0, %s51
      %s55 = sphi 0, %s54
      %s71 = sphi 0, %s55
      %s77 = sphi 0, %s79
      %s80 = sphi 0, %s77
      %s81 = sphi 0, %s80
      %s97 = sphi 0, %s81
      %s103 = sphi 0, %s105
      %s106 = sphi 0, %s103
      %s107 = sphi 0, %s106
      %s123 = sphi 0, %s107
    $region4: #{tpu_custom_call.1} parent=1 // loop_header_branch
      %18 = sbr.rel (%p16) target = $region8
    $region5: #{tpu_custom_call.1} parent=1 // loop_body
      %s20 = ssub.s32 %s15, 1
      %s21 = ssub.s32 %s15, 2
      %s22 = sadd.s32 %s15, 1
      %s23 = ssub.s32 %s15, %s22
      %p24 = scmp.eq.s32.totalorder %s23, 0
      %s26 = sadd.s32 %s25, 1
      %s27 = scalar_select %p24, %s25, %s26
      %p30 = pneg %p24
      %p31 = scmp.eq.s32.totalorder %s15, 1
      %p32 = por %p30, %p31
      %p33 = scmp.ne.s32.totalorder %s25, %s28
      %p34 = scmp.eq.s32.totalorder %s15, 0
      %p35 = por %p33, %p34
      %p36 = scmp.ne.s32.totalorder %s25, %s28
      %p37 = scmp.eq.s32.totalorder %s20, 1
      %p38 = por %p36, %p37
      %p39 = scmp.ne.s32.totalorder %s28, %s29
      %p40 = scmp.eq.s32.totalorder %s20, 0
      %p41 = por %p39, %p40
      %p42 = scmp.ne.s32.totalorder %s28, %s29
      %p43 = scmp.eq.s32.totalorder %s21, 1
      %p44 = por %p42, %p43
      %p46 = scmp.ne.s32.totalorder %s29, %s45
      %p47 = scmp.eq.s32.totalorder %s21, 0
      %p48 = por %p46, %p47
      %s49 = ssub.s32 %s15, %s22
      %p50 = scmp.eq.s32.totalorder %s49, 0
      %s52 = sadd.s32 %s51, 1
      %s53 = scalar_select %p50, %s51, %s52
      %p56 = pneg %p50
      %p57 = scmp.eq.s32.totalorder %s15, 1
      %p58 = por %p56, %p57
      %p59 = scmp.ne.s32.totalorder %s51, %s54
      %p60 = scmp.eq.s32.totalorder %s15, 0
      %p61 = por %p59, %p60
      %p62 = scmp.ne.s32.totalorder %s51, %s54
      %p63 = scmp.eq.s32.totalorder %s20, 1
      %p64 = por %p62, %p63
      %p65 = scmp.ne.s32.totalorder %s54, %s55
      %p66 = scmp.eq.s32.totalorder %s20, 0
      %p67 = por %p65, %p66
      %p68 = scmp.ne.s32.totalorder %s54, %s55
      %p69 = scmp.eq.s32.totalorder %s21, 1
      %p70 = por %p68, %p69
      %p72 = scmp.ne.s32.totalorder %s55, %s71
      %p73 = scmp.eq.s32.totalorder %s21, 0
      %p74 = por %p72, %p73
      %s75 = ssub.s32 %s15, %s22
      %p76 = scmp.eq.s32.totalorder %s75, 0
      %s78 = sadd.s32 %s77, 1
      %s79 = scalar_select %p76, %s77, %s78
      %p82 = pneg %p76
      %p83 = scmp.eq.s32.totalorder %s15, 1
      %p84 = por %p82, %p83
      %p85 = scmp.ne.s32.totalorder %s77, %s80
      %p86 = scmp.eq.s32.totalorder %s15, 0
      %p87 = por %p85, %p86
      %p88 = scmp.ne.s32.totalorder %s77, %s80
      %p89 = scmp.eq.s32.totalorder %s20, 1
      %p90 = por %p88, %p89
      %p91 = scmp.ne.s32.totalorder %s80, %s81
      %p92 = scmp.eq.s32.totalorder %s20, 0
      %p93 = por %p91, %p92
      %p94 = scmp.ne.s32.totalorder %s80, %s81
      %p95 = scmp.eq.s32.totalorder %s21, 1
      %p96 = por %p94, %p95
      %p98 = scmp.ne.s32.totalorder %s81, %s97
      %p99 = scmp.eq.s32.totalorder %s21, 0
      %p100 = por %p98, %p99
      %s101 = ssub.s32 %s15, %s22
      %p102 = scmp.eq.s32.totalorder %s101, 0
      %s104 = sadd.s32 %s103, 1
      %s105 = scalar_select %p102, %s103, %s104
      %p108 = pneg %p102
      %p109 = scmp.eq.s32.totalorder %s15, 1
      %p110 = por %p108, %p109
      %p111 = scmp.ne.s32.totalorder %s103, %s106
      %p112 = scmp.eq.s32.totalorder %s15, 0
      %p113 = por %p111, %p112
      %p114 = scmp.ne.s32.totalorder %s103, %s106
      %p115 = scmp.eq.s32.totalorder %s20, 1
      %p116 = por %p114, %p115
      %p117 = scmp.ne.s32.totalorder %s106, %s107
      %p118 = scmp.eq.s32.totalorder %s20, 0
      %p119 = por %p117, %p118
      %p120 = scmp.ne.s32.totalorder %s106, %s107
      %p121 = scmp.eq.s32.totalorder %s21, 1
      %p122 = por %p120, %p121
      %p124 = scmp.ne.s32.totalorder %s107, %s123
      %p125 = scmp.eq.s32.totalorder %s21, 0
      %p126 = por %p124, %p125
      %p127 = scmp.le.s32.totalorder 1, %s15
      %p128 = scmp.lt.s32.totalorder %s15, 3
      %p129 = pnand %p127, %p128
      %p130 = pneg %p129
      // Predicated region
      $region9: #{tpu_custom_call.1} parent=5 // pred_check
        _
      $region10: #{tpu_custom_call.1} parent=5 // pred_check_branch
        %132 = sbr.rel (%p129) target = $region12
      $region11: #{tpu_custom_call.1} parent=5 // pred_region
        %s133 = ssub.s32 %s15, 1
      $region12: #{tpu_custom_call.1} parent=5 // pred_fallthru
        _
      %p134 = scmp.lt.s32.totalorder %s15, 2
      // Predicated region
      $region13: #{tpu_custom_call.1} parent=5 // pred_check
        %p135 = pneg %p134
      $region14: #{tpu_custom_call.1} parent=5 // pred_check_branch
        %137 = sbr.rel (%p135) target = $region16
      $region15: #{tpu_custom_call.1} parent=5 // pred_region
        // Predicated region
        $region17: #{tpu_custom_call.1} parent=15 // pred_check
          %p138 = pneg %p35
        $region18: #{tpu_custom_call.1} parent=15 // pred_check_branch
          %140 = sbr.rel (%p138) target = $region20
        $region19: #{tpu_custom_call.1} parent=15 // pred_region
          %p141 = scmp.lt.s32.totalorder %s15, 1
          %s142 = scalar_select %p141, %s15, 1
          %s143 = smul.addr %s142, 8
          %s144 = scalar_lea.vmem %s0, %s143
        $region20: #{tpu_custom_call.1} parent=15 // pred_fallthru
          _
        // Predicated region
        $region21: #{tpu_custom_call.1} parent=15 // pred_check
          %p145 = pneg %p61
        $region22: #{tpu_custom_call.1} parent=15 // pred_check_branch
          %147 = sbr.rel (%p145) target = $region24
        $region23: #{tpu_custom_call.1} parent=15 // pred_region
          %s148 = sand.u32 %s51, 1
          %s149 = scalar_lea.sflag [#allocation3], %s148
          %s150 = sand.u32 %s51, 1
          %s151 = smul.addr %s150, 8
          %s152 = scalar_lea.vmem [#allocation2], %s151
          %s154 = ssub.s32 128, 128
          %155 = vsyncadd %s149, %s154
          %s156 = smul.addr %s15, 128
          %s157 = scalar_lea.hbm %s1, %s156
          %s159 = sshll.u32 %s152, 4
          %s160 = int_to_ptr.vmem [resolvable:$true] %s159
          %162 = dma.hbm_to_vmem [thread:$0]  %s157, 128, %s160, %s149
        $region24: #{tpu_custom_call.1} parent=15 // pred_fallthru
          _
        // Predicated region
        $region25: #{tpu_custom_call.1} parent=15 // pred_check
          %p163 = pneg %p87
        $region26: #{tpu_custom_call.1} parent=15 // pred_check_branch
          %165 = sbr.rel (%p163) target = $region28
        $region27: #{tpu_custom_call.1} parent=15 // pred_region
          %p166 = scmp.lt.s32.totalorder %s15, 1
          %s167 = scalar_select %p166, %s15, 1
          %s168 = smul.addr %s167, 8
          %s169 = scalar_lea.vmem %s2, %s168
        $region28: #{tpu_custom_call.1} parent=15 // pred_fallthru
          _
      $region16: #{tpu_custom_call.1} parent=5 // pred_fallthru
        _
      %p170 = scmp.le.s32.totalorder 1, %s15
      %p171 = scmp.lt.s32.totalorder %s15, 3
      %p172 = pnand %p170, %p171
      %p173 = pneg %p172
      // Predicated region
      $region29: #{tpu_custom_call.1} parent=5 // pred_check
        _
      $region30: #{tpu_custom_call.1} parent=5 // pred_check_branch
        %175 = sbr.rel (%p172) target = $region32
      $region31: #{tpu_custom_call.1} parent=5 // pred_region
        %s176 = ssub.s32 %s15, 1
        %s177 = sand.u32 %s54, 1
        %s178 = scalar_lea.sflag [#allocation3], %s177
        %s179 = sand.u32 %s54, 1
        %s180 = smul.addr %s179, 8
        %s181 = scalar_lea.vmem [#allocation2], %s180
        // Predicated region
        $region33: #{tpu_custom_call.1} parent=31 // pred_check
          %p182 = pneg %p67
        $region34: #{tpu_custom_call.1} parent=31 // pred_check_branch
          %184 = sbr.rel (%p182) target = $region36
        $region35: #{tpu_custom_call.1} parent=31 // pred_region
          %185 = dma.done %s178, 128
        $region36: #{tpu_custom_call.1} parent=31 // pred_fallthru
          _
        %p186 = scmp.lt.s32.totalorder %s20, 1
        %s187 = scalar_select %p186, %s20, 1
        %s188 = smul.addr %s187, 8
        %s189 = scalar_lea.vmem %s0, %s188
        %p190 = pneg %p41
        %p191 = pneg %p38
        %s192 = sand.u32 %s54, 1
        %s193 = scalar_lea.sflag [#allocation3], %s192
        %s194 = sand.u32 %s54, 1
        %s195 = smul.addr %s194, 8
        %s196 = scalar_lea.vmem [#allocation2], %s195
        %p197 = pneg %p67
        %p198 = pneg %p64
        %p199 = scmp.lt.s32.totalorder %s20, 1
        %s200 = scalar_select %p199, %s20, 1
        %s201 = smul.addr %s200, 8
        %s202 = scalar_lea.vmem %s2, %s201
        %p203 = pneg %p93
        %p204 = pneg %p90
        %p205 = pneg %p119
        %p206 = pneg %p116
        %s207 = sand.u32 %s106, 1
        %s208 = scalar_lea.sflag [#allocation4], %s207
        %s209 = sand.u32 %s106, 1
        %s210 = smul.addr %s209, 8
        %s211 = scalar_lea.vmem [#allocation5], %s210
        %p212 = scmp.lt.s32.totalorder %s20, 1
        %s213 = scalar_select %p212, %s20, 1
        %s214 = smul.addr %s213, 8
        %s215 = scalar_lea.vmem %s0, %s214
        %p216 = scmp.lt.s32.totalorder %s20, 1
        %s217 = scalar_select %p216, %s20, 1
        %s218 = smul.addr %s217, 8
        %s219 = scalar_lea.vmem %s2, %s218
        %v220 = vld [vmem:[%s215] sm:$0xff]
        %v221 = vld [vmem:[%s181] sm:$0xff]
        %v222 = vld [vmem:[%s219] sm:$0xff]
        %v223 = vlaneseq
        %v224 = vand.u32 %v223, 127
        %225 = vset.pattern.permute.xlu0 0
        %226 = vperm.xlu0 %225, %v222
        %v227 = vpop.permute.xlu0 %226
        %vm228 = vcmp.eq.s32.totalorder %v224, %v227
        %vm229 = vcmp.lt.s32.totalorder %v224, 40
        %230 = vadd.xlane.f32.xlu0 %v220
        %v231 = vpop.xlane.xlu0 %230
        %v232 = vmul.f32 %v231, 0.025
        %v233 = vsub.f32 %v220, %v232
        %234 = vadd.xlane.f32.xlu0 %v221
        %v235 = vpop.xlane.xlu0 %234
        %v236 = vmul.f32 %v235, 0.025
        %v237 = vsub.f32 %v221, %v236
        %v238 = vsel %vm229, %v233, -1e+30
        %239 = vmax.xlane.f32.xlu0 %v238
        %v240 = vpop.xlane.xlu0 %239
        %v241 = vsel %vm229, %v237, -1e+30
        %242 = vmax.xlane.f32.xlu0 %v241
        %v243 = vpop.xlane.xlu0 %242
        %v244 = vmul.f32 %v240, 0.33333334
        %v245 = vmax.f32 %v244, 1.0
        %v246 = vmul.f32 %v243, 0.33333334
        %v247 = vmax.f32 %v246, 1.0
        %v248 = vrcp.pop %v245
        %v249 = vmul.f32 1.0, %v248
        %v250 = vrcp.pop %v247
        %v251 = vmul.f32 1.0, %v250
        %v252 = vmul.f32 %v245, %v247
        %v253 = vsub.f32 %v233, %v240
        %v254 = vsub.f32 %v237, %v243
        %v255 = vsel %vm229, %v253, -1e+30
        %v256 = vsel %vm229, %v254, -1e+30
        %v257 = vmul.f32 %v255, %v249
        %v258 = vmul.f32 %v256, %v251
        %v259 = vmul.f32 %v257, 1.442695
        %v260 = vpow.pop %v259
        %v261 = vmul.f32 %v258, 1.442695
        %v262 = vpow.pop %v261
        %v263 = vmul.f32 %v256, 1.442695
        %v264 = vpow.pop %v263
        %v265 = vsel %vm228, %v233, 0.0
        %266 = vadd.xlane.f32.xlu0 %v265
        %v267 = vpop.xlane.xlu0 %266
        %v268 = vsel %vm228, %v237, 0.0
        %269 = vadd.xlane.f32.xlu0 %v268
        %v270 = vpop.xlane.xlu0 %269
        %v271 = vsub.f32 %v267, %v240
        %v272 = vmul.f32 %v271, %v249
        %v273 = vsub.f32 %v270, %v243
        %v274 = vmul.f32 %v273, %v251
        %v275 = vmul.f32 %v272, 1.442695
        %v276 = vpow.pop %v275
        %v277 = vmul.f32 %v274, 1.442695
        %v278 = vpow.pop %v277
        %v279 = vsel %vm228, 0.0, %v260
        %280 = vadd.xlane.f32.xlu0 %v279
        %v281 = vpop.xlane.xlu0 %280
        %v282 = vsel %vm228, 0.0, %v262
        %283 = vadd.xlane.f32.xlu0 %v282
        %v284 = vpop.xlane.xlu0 %283
        %v285 = vadd.f32 %v281, %v276
        %v286 = vadd.f32 %v284, %v278
        %287 = vadd.xlane.f32.xlu0 %v264
        %v288 = vpop.xlane.xlu0 %287
        %v289 = vlog2.pop %v285
        %v290 = vmul.f32 %v289, 0.6931472
        %v291 = vlog2.pop %v286
        %v292 = vmul.f32 %v291, 0.6931472
        %v293 = vlog2.pop %v281
        %v294 = vmul.f32 %v293, 0.6931472
        %v295 = vlog2.pop %v284
        %v296 = vmul.f32 %v295, 0.6931472
        %v297 = vlog2.pop %v288
        %v298 = vmul.f32 %v297, 0.6931472
        %v299 = vsub.f32 %v273, %v298
        %v300 = vsub.f32 0.0, %v299
        %v301 = vsub.f32 %v296, %v294
        %v302 = vsub.f32 %v257, %v258
        %v303 = vadd.f32 %v302, %v301
        %v304 = vmul.f32 %v260, %v303
        %305 = vadd.xlane.f32.xlu0 %v304
        %v306 = vpop.xlane.xlu0 %305
        %v307 = vsub.f32 %v272, %v274
        %v308 = vadd.f32 %v307, %v301
        %v309 = vmul.f32 %v276, %v308
        %v310 = vsub.f32 %v306, %v309
        %v311 = vrcp.pop %v281
        %v312 = vmul.f32 %v310, %v311
        %v313 = vrcp.pop %v285
        %v314 = vmul.f32 %v276, %v313
        %v315 = vmul.f32 %v281, %v313
        %v316 = vsub.f32 %v272, %v290
        %v317 = vsub.f32 %v274, %v292
        %v318 = vsub.f32 %v294, %v290
        %v319 = vsub.f32 %v296, %v292
        %v320 = vsub.f32 %v316, %v317
        %v321 = vmul.f32 %v314, %v320
        %v322 = vsub.f32 %v318, %v319
        %v323 = vmul.f32 %v315, %v322
        %v324 = vadd.f32 %v321, %v323
        %s325 = smul.u32 %s20, 8
        %v326 = vlaneseq
        %v327 = vshrl.u32 %v326, 7
        %v328 = vstv %s325
        %v329 = vadd.s32 %v328, %v327
        %vm330 = vcmp.lt.s32.totalorder %v329, 10
        %v331 = vsel %vm330, 1, 0
        %v332 = vcvt.s32.f32 %v331
        %v333 = vmul.f32 %v300, %v332
        %v334 = vmul.f32 %v252, %v332
        %vm335 = vcmask 7168
        %v336 = vsel %vm335, %v333, 0.0
        %337 = vadd.xlane.f32.xlu0 %v336
        %v338 = vpop.xlane.xlu0 %337
        %v339 = vrot.slane %v338, 4
        %v340 = vadd.f32 %v338, %v339
        %v341 = vrot.slane %v340, 2
        %v342 = vadd.f32 %v340, %v341
        %v343 = vrot.slane %v342, 1
        %v344 = vadd.f32 %v342, %v343
        %s345 = vtos %v344
        %v346 = vmul.f32 %v324, %v334
        %v347 = vsel %vm335, %v346, 0.0
        %348 = vadd.xlane.f32.xlu0 %v347
        %v349 = vpop.xlane.xlu0 %348
        %v350 = vrot.slane %v349, 4
        %v351 = vadd.f32 %v349, %v350
        %v352 = vrot.slane %v351, 2
        %v353 = vadd.f32 %v351, %v352
        %v354 = vrot.slane %v353, 1
        %v355 = vadd.f32 %v353, %v354
        %s356 = vtos %v355
        %v357 = vmul.f32 %v312, %v334
        %v358 = vsel %vm335, %v357, 0.0
        %359 = vadd.xlane.f32.xlu0 %v358
        %v360 = vpop.xlane.xlu0 %359
        %v361 = vrot.slane %v360, 4
        %v362 = vadd.f32 %v360, %v361
        %v363 = vrot.slane %v362, 2
        %v364 = vadd.f32 %v362, %v363
        %v365 = vrot.slane %v364, 1
        %v366 = vadd.f32 %v364, %v365
        %s367 = vtos %v366
        %vm368 = vcmp.eq.s32.totalorder %v327, 0
        %vm369 = vcmp.eq.s32.totalorder %v224, 0
        %vm370 = vmand %vm368, %vm369
        %vm371 = vcmp.eq.s32.totalorder %v224, 1
        %vm372 = vmand %vm368, %vm371
        %vm373 = vcmp.eq.s32.totalorder %v224, 2
        %vm374 = vmand %vm368, %vm373
        %v375 = vstv %s367
        %v376 = vsel %vm374, %v375, 0.0
        %v377 = vstv %s356
        %v378 = vsel %vm372, %v377, %v376
        %v379 = vstv %s345
        %v380 = vsel %vm370, %v379, %v378
        %381 = vst [vmem:[%s211] sm:$0xff] %v380
        %s382 = sand.u32 %s106, 1
        %s383 = scalar_lea.sflag [#allocation4], %s382
        %s384 = sand.u32 %s106, 1
        %s385 = smul.addr %s384, 8
        %s386 = scalar_lea.vmem [#allocation5], %s385
        // Predicated region
        $region37: #{tpu_custom_call.1} parent=31 // pred_check
          %p387 = pneg %p116
        $region38: #{tpu_custom_call.1} parent=31 // pred_check_branch
          %389 = sbr.rel (%p387) target = $region40
        $region39: #{tpu_custom_call.1} parent=31 // pred_region
          %s391 = ssub.s32 128, 128
          %392 = vsyncadd %s383, %s391
          %s393 = smul.addr %s20, 128
          %s394 = scalar_lea.hbm %s3, %s393
          %s396 = sshll.u32 %s386, 4
          %s397 = int_to_ptr.vmem [resolvable:$true] %s396
          %399 = dma.vmem_to_hbm [thread:$0]  %s397, 128, %s394, %s383
        $region40: #{tpu_custom_call.1} parent=31 // pred_fallthru
          _
      $region32: #{tpu_custom_call.1} parent=5 // pred_fallthru
        _
      %p400 = scmp.le.s32.totalorder 2, %s15
      // Predicated region
      $region41: #{tpu_custom_call.1} parent=5 // pred_check
        %p401 = pneg %p400
      $region42: #{tpu_custom_call.1} parent=5 // pred_check_branch
        %403 = sbr.rel (%p401) target = $region44
      $region43: #{tpu_custom_call.1} parent=5 // pred_region
        %s404 = ssub.s32 %s15, 2
        // Predicated region
        $region45: #{tpu_custom_call.1} parent=43 // pred_check
          %p405 = pneg %p122
        $region46: #{tpu_custom_call.1} parent=43 // pred_check_branch
          %407 = sbr.rel (%p405) target = $region48
        $region47: #{tpu_custom_call.1} parent=43 // pred_region
          %s408 = sand.u32 %s107, 1
          %s409 = scalar_lea.sflag [#allocation4], %s408
          %s410 = sand.u32 %s107, 1
          %s411 = smul.addr %s410, 8
          %s412 = scalar_lea.vmem [#allocation5], %s411
          %413 = dma.done %s409, 128
        $region48: #{tpu_custom_call.1} parent=43 // pred_fallthru
          _
      $region44: #{tpu_custom_call.1} parent=5 // pred_fallthru
        _
    $region6: #{tpu_custom_call.1} parent=1 // loop_footer
      %s19 = sadd.s32 1, %s15
    $region7: #{tpu_custom_call.1} parent=1 // loop_footer_branch
      %14 = sbr.rel target = $region3
    $region8: #{tpu_custom_call.1} parent=1 // loop_exit
      _
    %414 = vsyncpa [#allocation3], 1
    %s415 = scalar_lea.sflag [#allocation3], 1
    %416 = vsyncpa %s415, 1
    %417 = vsyncpa [#allocation4], 1
    %s418 = scalar_lea.sflag [#allocation4], 1
    %419 = vsyncpa %s418, 1

</llo_original>
